<compile_context>
chip_gen: v5e
topology: v5e:2x2
jax: 0.10.0
libtpu: 0.0.40
codegen_flags: <defaults>
</compile_context>

<pallas_src>
import numpy as np
import jax
import jax.numpy as jnp
from jax.experimental import pallas as pl
from jax.experimental.pallas import tpu as pltpu

LEAKY_SLOPE = 0.1


def _mlp_prior_kernel(c0_ref, cH_ref, w1a_ref, w1b_ref, bias_ref, w2_ref, out_ref):
    # First linear; concat folded into the contraction (two MXU passes summed
    # in f32).  bias row 0 broadcasts over the batch tile.
    h = (jnp.dot(c0_ref[...], w1a_ref[...], preferred_element_type=jnp.float32)
         + jnp.dot(cH_ref[...], w1b_ref[...], preferred_element_type=jnp.float32)
         + bias_ref[0:1, :])

    # LeakyReLU(0.1): pure VPU elementwise, kept in f32 (v5e has no bf16 VPU).
    h = jnp.where(h >= 0.0, h, LEAKY_SLOPE * h)

    # Second linear (H*T x H*T), f32 accumulation, bias row 1.
    y = (jnp.dot(h.astype(w2_ref.dtype), w2_ref[...],
                 preferred_element_type=jnp.float32)
         + bias_ref[1:2, :])

    out_ref[...] = y.astype(out_ref.dtype)


def mlp_trajectory_prior(cond0, cond_last, params, horizon, transition_dim,
                         *, matmul_dtype=jnp.float32):
    """Forward pass of MLPTrajectoryPrior.

    cond0, cond_last : (B, observation_dim)   -- cond[0] and cond[horizon-1]
    params = (w1, b1, w2, b2) in PyTorch nn.Linear layout:
        w1 : (H*T, 2*observation_dim), b1 : (H*T,)
        w2 : (H*T, H*T),               b2 : (H*T,)
    returns (B, horizon, transition_dim)
    """
    w1, b1, w2, b2 = params
    B, obs_dim = cond0.shape
    HT = int(w1.shape[0])
    assert HT == horizon * transition_dim
    assert int(w1.shape[1]) == 2 * obs_dim

    # Pre-transpose weights to (in, out) so the kernel computes (B,in)@(in,out),
    # and split W1 on the feature-concat boundary (done once, outside the grid).
    w1_t = jnp.transpose(w1).astype(matmul_dtype)             # (2*obs, HT)
    w1a = w1_t[:obs_dim, :]                                   # (obs, HT) -> acts on cond0
    w1b = w1_t[obs_dim:, :]                                   # (obs, HT) -> acts on cond[H-1]
    w2_t = jnp.transpose(w2).astype(matmul_dtype)             # (HT, HT)
    biases = jnp.stack([b1, b2], axis=0).astype(jnp.float32)  # packed (2, HT)

    out_dtype = cond0.dtype
    c0 = cond0.astype(matmul_dtype)
    cH = cond_last.astype(matmul_dtype)

    # Batch tiling: a block equal to the full dim is always legal, so small B
    # runs in a single grid step; large B uses 512-row tiles (divisible by 8,
    # tiny VMEM footprint, >=2 parallel blocks for v7x megacore).
    B_TILE = B if B <= 512 else 512
    pad = (-B) % B_TILE
    if pad:
        c0 = jnp.pad(c0, ((0, pad), (0, 0)))
        cH = jnp.pad(cH, ((0, pad), (0, 0)))
    Bp = B + pad
    grid = (Bp // B_TILE,)

    # VMEM budget: double-buffered streamed tiles + resident weights/biases +
    # f32 intermediates; clamp well under v7x's 64 MiB physical VMEM.
    w_item = jnp.dtype(matmul_dtype).itemsize
    o_item = jnp.dtype(out_dtype).itemsize
    vmem_need = (2 * (2 * B_TILE * obs_dim * w_item + B_TILE * HT * o_item)  # streamed in/out (x2 buf)
                 + (2 * obs_dim * HT + HT * HT) * w_item                    # resident weights
                 + 2 * HT * 4                                               # packed biases
                 + 2 * B_TILE * HT * 4)                                     # f32 h / y intermediates
    vmem_limit = int(min(48 * 1024 * 1024, max(2 * vmem_need, 8 * 1024 * 1024)))

    out = pl.pallas_call(
        _mlp_prior_kernel,
        out_shape=jax.ShapeDtypeStruct((Bp, HT), out_dtype),
        grid_spec=pltpu.PrefetchScalarGridSpec(
            num_scalar_prefetch=0,
            grid=grid,
            in_specs=[
                pl.BlockSpec((B_TILE, obs_dim), lambda i: (i, 0)),  # cond0 tile (streamed)
                pl.BlockSpec((B_TILE, obs_dim), lambda i: (i, 0)),  # cond[H-1] tile (streamed)
                pl.BlockSpec((obs_dim, HT), lambda i: (0, 0)),      # W1a (resident)
                pl.BlockSpec((obs_dim, HT), lambda i: (0, 0)),      # W1b (resident)
                pl.BlockSpec((2, HT), lambda i: (0, 0)),            # packed biases (resident)
                pl.BlockSpec((HT, HT), lambda i: (0, 0)),           # W2 (resident)
            ],
            out_specs=pl.BlockSpec((B_TILE, HT), lambda i: (i, 0)), # lane-dense output
        ),
        compiler_params=pltpu.CompilerParams(
            dimension_semantics=("parallel",),
            vmem_limit_bytes=vmem_limit),
    )(c0, cH, w1a, w1b, biases, w2_t)

    out = out[:B]
    # Contiguous (B, H*T) -> (B, H, T): pure row-major metadata reshape,
    # identical to torch.reshape in the module.
    return out.reshape(B, horizon, transition_dim)


def reference(cond0, cond_last, params, horizon, transition_dim):
    """Pure-JAX reference mirroring the PyTorch module semantics."""
    w1, b1, w2, b2 = params
    x = jnp.concatenate([cond0, cond_last], axis=1)
    h = x @ w1.T + b1
    h = jnp.where(h >= 0.0, h, LEAKY_SLOPE * h)          # LeakyReLU(0.1)
    y = h @ w2.T + b2
    return y.reshape(-1, horizon, transition_dim)


if __name__ == "__main__":
    key = jax.random.PRNGKey(0)
    # Small shapes consistent with the module; chosen so H*T == 128 (lane-dense).
    B = 2
    action_dim = 5
    observation_dim = 11
    horizon = 8
    transition_dim = observation_dim + action_dim        # 16
    HT = horizon * transition_dim                         # 128

    keys = jax.random.split(key, 6)
    # cond is a dict keyed by timestep, as in the PyTorch forward.
    cond = {
        0: jax.random.normal(keys[0], (B, observation_dim), jnp.float32),
        horizon - 1: jax.random.normal(keys[1], (B, observation_dim), jnp.float32),
    }
    w1 = 0.2 * jax.random.normal(keys[2], (HT, 2 * observation_dim), jnp.float32)
    b1 = 0.1 * jax.random.normal(keys[3], (HT,), jnp.float32)
    w2 = 0.2 * jax.random.normal(keys[4], (HT, HT), jnp.float32)
    b2 = 0.1 * jax.random.normal(keys[5], (HT,), jnp.float32)
    params = (w1, b1, w2, b2)

    y = mlp_trajectory_prior(cond[0], cond[horizon - 1], params,
                             horizon, transition_dim)
    y = jax.block_until_ready(y)

    y_ref = reference(cond[0], cond[horizon - 1], params, horizon, transition_dim)
    np.testing.assert_allclose(np.asarray(y), np.asarray(y_ref),
                               rtol=1e-4, atol=1e-4)
    assert y.shape == (B, horizon, transition_dim)
    print("KERNEL_OK")
</pallas_src>

<mosaic_0001>
module attributes {stable_mosaic.version = 11 : i64} {
  func.func @_mlp_prior_kernel(%arg0: i32, %arg1: memref<2x11xf32, #tpu.memory_space<vmem>>, %arg2: memref<2x11xf32, #tpu.memory_space<vmem>>, %arg3: memref<11x128xf32, #tpu.memory_space<vmem>>, %arg4: memref<11x128xf32, #tpu.memory_space<vmem>>, %arg5: memref<2x128xf32, #tpu.memory_space<vmem>>, %arg6: memref<128x128xf32, #tpu.memory_space<vmem>>, %arg7: memref<2x128xf32, #tpu.memory_space<vmem>>) attributes {dimension_semantics = [#tpu.dimension_semantics<parallel>], iteration_bounds = array<i64: 1>, scalar_prefetch = 0 : i64, scratch_operands = 0 : i64, tpu.core_type = #tpu.core_type<tc>, window_params = [{transform_indices = @transform_0, window_bounds = array<i64: 2, 11>}, {transform_indices = @transform_1, window_bounds = array<i64: 2, 11>}, {pipeline_mode = #tpu.pipeline_mode<synchronous>, transform_indices = @transform_2, window_bounds = array<i64: 11, 128>}, {pipeline_mode = #tpu.pipeline_mode<synchronous>, transform_indices = @transform_3, window_bounds = array<i64: 11, 128>}, {pipeline_mode = #tpu.pipeline_mode<synchronous>, transform_indices = @transform_4, window_bounds = array<i64: 2, 128>}, {pipeline_mode = #tpu.pipeline_mode<synchronous>, transform_indices = @transform_5, window_bounds = array<i64: 128, 128>}, {transform_indices = @transform_6, window_bounds = array<i64: 2, 128>}]} {
    %c0 = arith.constant 0 : index
    %c0_0 = arith.constant 0 : index
    %0 = vector.load %arg1[%c0, %c0_0] : memref<2x11xf32, #tpu.memory_space<vmem>>, vector<2x11xf32>
    %c0_1 = arith.constant 0 : index
    %c0_2 = arith.constant 0 : index
    %1 = vector.load %arg3[%c0_1, %c0_2] : memref<11x128xf32, #tpu.memory_space<vmem>>, vector<11x128xf32>
    %cst = arith.constant dense<0.000000e+00> : vector<2x128xf32>
    %2 = tpu.matmul %0, %1, %cst {dimension_numbers = #tpu.dot_dimension_numbers<[1], [0], [0], [1], [0, 0, 1, 1], [], []>} : vector<2x11xf32>, vector<11x128xf32>, vector<2x128xf32> -> vector<2x128xf32>
    %c0_3 = arith.constant 0 : index
    %c0_4 = arith.constant 0 : index
    %3 = vector.load %arg2[%c0_3, %c0_4] : memref<2x11xf32, #tpu.memory_space<vmem>>, vector<2x11xf32>
    %c0_5 = arith.constant 0 : index
    %c0_6 = arith.constant 0 : index
    %4 = vector.load %arg4[%c0_5, %c0_6] : memref<11x128xf32, #tpu.memory_space<vmem>>, vector<11x128xf32>
    %cst_7 = arith.constant dense<0.000000e+00> : vector<2x128xf32>
    %5 = tpu.matmul %3, %4, %cst_7 {dimension_numbers = #tpu.dot_dimension_numbers<[1], [0], [0], [1], [0, 0, 1, 1], [], []>} : vector<2x11xf32>, vector<11x128xf32>, vector<2x128xf32> -> vector<2x128xf32>
    %6 = arith.addf %2, %5 : vector<2x128xf32>
    %c0_8 = arith.constant 0 : index
    %c0_9 = arith.constant 0 : index
    %7 = vector.load %arg5[%c0_8, %c0_9] : memref<2x128xf32, #tpu.memory_space<vmem>>, vector<1x128xf32>
    %8 = vector.broadcast %7 : vector<1x128xf32> to vector<2x128xf32>
    %9 = arith.addf %6, %8 : vector<2x128xf32>
    %cst_10 = arith.constant 0.000000e+00 : f32
    %10 = vector.broadcast %cst_10 : f32 to vector<2x128xf32>
    %11 = arith.cmpf oge, %9, %10 : vector<2x128xf32>
    %cst_11 = arith.constant 1.000000e-01 : f32
    %12 = vector.broadcast %cst_11 : f32 to vector<2x128xf32>
    %13 = arith.mulf %12, %9 : vector<2x128xf32>
    %14 = arith.select %11, %9, %13 : vector<2x128xi1>, vector<2x128xf32>
    %c0_12 = arith.constant 0 : index
    %c0_13 = arith.constant 0 : index
    %15 = vector.load %arg6[%c0_12, %c0_13] : memref<128x128xf32, #tpu.memory_space<vmem>>, vector<128x128xf32>
    %cst_14 = arith.constant dense<0.000000e+00> : vector<2x128xf32>
    %16 = tpu.matmul %14, %15, %cst_14 {dimension_numbers = #tpu.dot_dimension_numbers<[1], [0], [0], [1], [0, 0, 1, 1], [], []>} : vector<2x128xf32>, vector<128x128xf32>, vector<2x128xf32> -> vector<2x128xf32>
    %c1 = arith.constant 1 : index
    %c0_15 = arith.constant 0 : index
    %17 = vector.load %arg5[%c1, %c0_15] : memref<2x128xf32, #tpu.memory_space<vmem>>, vector<1x128xf32>
    %18 = vector.broadcast %17 : vector<1x128xf32> to vector<2x128xf32>
    %19 = arith.addf %16, %18 : vector<2x128xf32>
    %c0_16 = arith.constant 0 : index
    %c0_17 = arith.constant 0 : index
    %20 = vector.load %arg7[%c0_16, %c0_17] : memref<2x128xf32, #tpu.memory_space<vmem>>, vector<2x128xf32>
    tpu.vector_store %arg7[%c0_16, %c0_17], %19 {strides = array<i32>} : memref<2x128xf32, #tpu.memory_space<vmem>>, vector<2x128xf32>,
    return
  }
  func.func @transform_0(%arg0: i32) -> (i32, i32) {
    %c0_i32 = arith.constant 0 : i32
    %c0_i32_0 = arith.constant 0 : i32
    return %arg0, %c0_i32 : i32, i32
  }
  func.func @transform_1(%arg0: i32) -> (i32, i32) {
    %c0_i32 = arith.constant 0 : i32
    %c0_i32_0 = arith.constant 0 : i32
    return %arg0, %c0_i32 : i32, i32
  }
  func.func @transform_2(%arg0: i32) -> (i32, i32) {
    %c0_i32 = arith.constant 0 : i32
    %c0_i32_0 = arith.constant 0 : i32
    %c0_i32_1 = arith.constant 0 : i32
    return %c0_i32, %c0_i32_0 : i32, i32
  }
  func.func @transform_3(%arg0: i32) -> (i32, i32) {
    %c0_i32 = arith.constant 0 : i32
    %c0_i32_0 = arith.constant 0 : i32
    %c0_i32_1 = arith.constant 0 : i32
    return %c0_i32, %c0_i32_0 : i32, i32
  }
  func.func @transform_4(%arg0: i32) -> (i32, i32) {
    %c0_i32 = arith.constant 0 : i32
    %c0_i32_0 = arith.constant 0 : i32
    %c0_i32_1 = arith.constant 0 : i32
    return %c0_i32, %c0_i32_0 : i32, i32
  }
  func.func @transform_5(%arg0: i32) -> (i32, i32) {
    %c0_i32 = arith.constant 0 : i32
    %c0_i32_0 = arith.constant 0 : i32
    %c0_i32_1 = arith.constant 0 : i32
    return %c0_i32, %c0_i32_0 : i32, i32
  }
  func.func @transform_6(%arg0: i32) -> (i32, i32) {
    %c0_i32 = arith.constant 0 : i32
    %c0_i32_0 = arith.constant 0 : i32
    return %arg0, %c0_i32 : i32, i32
  }
}

</mosaic_0001>

<llo_original>
// kernel: tpu_custom_call.1
$region0: #{tpu_custom_call.1}
  #allocation0 [shape = 'u32[]', space=smem, size = 0x4, offset = 0x4, fixed_abs, tag = 'smem constant byte address 0x4 - core index']
  #allocation1 [shape = 'u32[72,128]{1,0:T(1,128)}', space=vmem, size = 0x9000, scoped, tag = 'internal scratch']
  %s0 = inlined_call_operand.hbm [shape: f32[2,11], index: 0, kind: input, shape index: {}]
  %s1 = inlined_call_operand.hbm [shape: f32[2,11], index: 1, kind: input, shape index: {}]
  %s2 = inlined_call_operand.hbm [shape: f32[11,128], index: 2, kind: input, shape index: {}]
  %s3 = inlined_call_operand.hbm [shape: f32[11,128], index: 3, kind: input, shape index: {}]
  %s4 = inlined_call_operand.vmem [shape: f32[2,128], index: 4, kind: input, shape index: {}]
  %s5 = inlined_call_operand.hbm [shape: f32[128,128], index: 5, kind: input, shape index: {}]
  %s6 = inlined_call_operand.hbm [shape: f32[2,128], index: 6, kind: output, shape index: {}]
  %s7 = sld [smem:[#allocation0]]
  $region54: #{tpu_custom_call.1} parent=0
    _
  %s9 = ssub.s32 1, %s7
  %s10 = scalar_select 0, %s9, %s7
  $region1: #{tpu_custom_call.1} parent=0
    #allocation2 [shape = 'u8[1024]{0}', space=vmem, size = 0x400, scoped, tag = 'input window, operand 0, single buffered']
    #allocation3 [shape = 's32[1]{0}', space=sflag, size = 0x4, scoped, tag = 'scoped memory for tpu_custom_call.1']
    #allocation4 [shape = 's32[1]{0}', space=sflag, size = 0x4, scoped, tag = 'scoped memory for tpu_custom_call.1']
    #allocation5 [shape = 'u8[1024]{0}', space=vmem, size = 0x400, scoped, tag = 'input window, operand 1, single buffered']
    #allocation6 [shape = 's32[1]{0}', space=sflag, size = 0x4, scoped, tag = 'scoped memory for tpu_custom_call.1']
    #allocation7 [shape = 'u8[8192]{0}', space=vmem, size = 0x2000, scoped, tag = 'input window, operand 2, single buffered']
    #allocation8 [shape = 'u8[8192]{0}', space=vmem, size = 0x2000, scoped, tag = 'input window, operand 3, single buffered']
    #allocation9 [shape = 's32[1]{0}', space=sflag, size = 0x4, scoped, tag = 'scoped memory for tpu_custom_call.1']
    #allocation10 [shape = 'u8[65536]{0}', space=vmem, size = 0x10000, scoped, tag = 'input window, operand 5, single buffered']
    #allocation11 [shape = 'u8[1024]{0}', space=vmem, size = 0x400, scoped, tag = 'output window, operand 0, single buffered']
    %11 = vsyncpa [#allocation3], 0
    %12 = vsyncpa [#allocation6], 0
    %13 = vsyncpa [#allocation9], 0
    %14 = vsyncpa [#allocation4], 0
    // Predicated region
    $region2: #{tpu_custom_call.1} parent=1 // pred_check
      _
    $region3: #{tpu_custom_call.1} parent=1 // pred_check_branch
      %16 = sbr.rel (0) target = $region5
    $region4: #{tpu_custom_call.1} parent=1 // pred_region
      %18 = vsyncadd [#allocation3], 0
      %s20 = sshll.u32 %s0, 4
      %s21 = int_to_ptr.hbm [resolvable:$true] %s20
      %s22 = sshll.u32 [#allocation2], 4
      %s23 = int_to_ptr.vmem [resolvable:$true] %s22
      %25 = dma.hbm_to_vmem [thread:$0]  %s21, 32, %s23, [#allocation3]
    $region5: #{tpu_custom_call.1} parent=1 // pred_fallthru
      _
    // Predicated region
    $region6: #{tpu_custom_call.1} parent=1 // pred_check
      _
    $region7: #{tpu_custom_call.1} parent=1 // pred_check_branch
      %27 = sbr.rel (0) target = $region9
    $region8: #{tpu_custom_call.1} parent=1 // pred_region
      %29 = vsyncadd [#allocation6], 0
      %s31 = sshll.u32 %s1, 4
      %s32 = int_to_ptr.hbm [resolvable:$true] %s31
      %s33 = sshll.u32 [#allocation5], 4
      %s34 = int_to_ptr.vmem [resolvable:$true] %s33
      %36 = dma.hbm_to_vmem [thread:$0]  %s32, 32, %s34, [#allocation6]
    $region9: #{tpu_custom_call.1} parent=1 // pred_fallthru
      _
    // Predicated region
    $region10: #{tpu_custom_call.1} parent=1 // pred_check
      _
    $region11: #{tpu_custom_call.1} parent=1 // pred_check_branch
      %38 = sbr.rel (0) target = $region13
    $region12: #{tpu_custom_call.1} parent=1 // pred_region
      %40 = vsyncadd [#allocation6], 0
      %s41 = sshll.u32 %s2, 4
      %s42 = int_to_ptr.hbm [resolvable:$true] %s41
      %s43 = sshll.u32 [#allocation7], 4
      %s44 = int_to_ptr.vmem [resolvable:$true] %s43
      %49 = dma.hbm_to_vmem [thread:$0]  %s42, 256, %s44, [#allocation6], 128, 128, 8
    $region13: #{tpu_custom_call.1} parent=1 // pred_fallthru
      _
    // Predicated region
    $region14: #{tpu_custom_call.1} parent=1 // pred_check
      _
    $region15: #{tpu_custom_call.1} parent=1 // pred_check_branch
      %51 = sbr.rel (0) target = $region17
    $region16: #{tpu_custom_call.1} parent=1 // pred_region
      %53 = vsyncadd [#allocation9], 0
      %s54 = sshll.u32 %s3, 4
      %s55 = int_to_ptr.hbm [resolvable:$true] %s54
      %s56 = sshll.u32 [#allocation8], 4
      %s57 = int_to_ptr.vmem [resolvable:$true] %s56
      %62 = dma.hbm_to_vmem [thread:$0]  %s55, 256, %s57, [#allocation9], 128, 128, 8
    $region17: #{tpu_custom_call.1} parent=1 // pred_fallthru
      _
    // Predicated region
    $region18: #{tpu_custom_call.1} parent=1 // pred_check
      _
    $region19: #{tpu_custom_call.1} parent=1 // pred_check_branch
      %64 = sbr.rel (0) target = $region21
    $region20: #{tpu_custom_call.1} parent=1 // pred_region
      _
    $region21: #{tpu_custom_call.1} parent=1 // pred_fallthru
      _
    // Predicated region
    $region22: #{tpu_custom_call.1} parent=1 // pred_check
      _
    $region23: #{tpu_custom_call.1} parent=1 // pred_check_branch
      %66 = sbr.rel (0) target = $region25
    $region24: #{tpu_custom_call.1} parent=1 // pred_region
      %68 = vsyncadd [#allocation9], 0
      %s69 = sshll.u32 %s5, 4
      %s70 = int_to_ptr.hbm [resolvable:$true] %s69
      %s71 = sshll.u32 [#allocation10], 4
      %s72 = int_to_ptr.vmem [resolvable:$true] %s71
      %77 = dma.hbm_to_vmem [thread:$0]  %s70, 2048, %s72, [#allocation9], 128, 128, 8
    $region25: #{tpu_custom_call.1} parent=1 // pred_fallthru
      _
    // Predicated region
    $region26: #{tpu_custom_call.1} parent=1 // pred_check
      _
    $region27: #{tpu_custom_call.1} parent=1 // pred_check_branch
      %79 = sbr.rel (0) target = $region29
    $region28: #{tpu_custom_call.1} parent=1 // pred_region
      %81 = dma.done [#allocation3], 32
    $region29: #{tpu_custom_call.1} parent=1 // pred_fallthru
      _
    // Predicated region
    $region30: #{tpu_custom_call.1} parent=1 // pred_check
      _
    $region31: #{tpu_custom_call.1} parent=1 // pred_check_branch
      %83 = sbr.rel (0) target = $region33
    $region32: #{tpu_custom_call.1} parent=1 // pred_region
      %85 = dma.done [#allocation6], 32
    $region33: #{tpu_custom_call.1} parent=1 // pred_fallthru
      _
    // Predicated region
    $region34: #{tpu_custom_call.1} parent=1 // pred_check
      _
    $region35: #{tpu_custom_call.1} parent=1 // pred_check_branch
      %87 = sbr.rel (0) target = $region37
    $region36: #{tpu_custom_call.1} parent=1 // pred_region
      %89 = dma.done [#allocation6], 256
    $region37: #{tpu_custom_call.1} parent=1 // pred_fallthru
      _
    // Predicated region
    $region38: #{tpu_custom_call.1} parent=1 // pred_check
      _
    $region39: #{tpu_custom_call.1} parent=1 // pred_check_branch
      %91 = sbr.rel (0) target = $region41
    $region40: #{tpu_custom_call.1} parent=1 // pred_region
      %93 = dma.done [#allocation9], 256
    $region41: #{tpu_custom_call.1} parent=1 // pred_fallthru
      _
    // Predicated region
    $region42: #{tpu_custom_call.1} parent=1 // pred_check
      _
    $region43: #{tpu_custom_call.1} parent=1 // pred_check_branch
      %95 = sbr.rel (0) target = $region45
    $region44: #{tpu_custom_call.1} parent=1 // pred_region
      %97 = dma.done [#allocation9], 2048
    $region45: #{tpu_custom_call.1} parent=1 // pred_fallthru
      _
    %v98 = vld [vmem:[#allocation2] sm:$0x3]
    %v99 = vld [vmem:[#allocation7] sm:$0xff]
    %v100 = vld [vmem:[#allocation7 + $0x8] sm:$0x7]
    %v101 = vld [vmem:[#allocation5] sm:$0x3]
    %v102 = vld [vmem:[#allocation8] sm:$0xff]
    %v103 = vld [vmem:[#allocation8 + $0x8] sm:$0x7]
    %vm104 = vcmask 89088
    %v106 = vsel %vm104, %v101, 0
    %vm108 = vcmask 1042432
    %v110 = vsel %vm108, %v103, 0
    %112 = vmatpush.msra.mxu0 0.0
    %113 = vmatpush.msra.mxu0 0.0
    %114 = vmatpush.msra.mxu0 0.0
    %115 = vmatpush.msra.mxu0 0.0
    %116 = vmatpush.msra.mxu0 0.0
    %117 = vmatpush.msra.mxu0 0.0
    %118 = vmatpush.msra.mxu0 0.0
    %119 = vmatpush.msra.mxu0 0.0
    %120 = vmatpush.msra.mxu0 0.0
    %121 = vmatpush.msra.mxu0 0.0
    %122 = vmatpush.msra.mxu0 0.0
    %123 = vmatpush.msra.mxu0 0.0
    %124 = vmatpush.msra.mxu0 0.0
    %125 = vmatpush.msra.mxu0 0.0
    %126 = vmatpush.msra.mxu0 %v110
    %127 = vmatpush.msra.mxu0 %v102
    %128 = vmatmul.f32.gmra.mxu0 %v106
    %v129 = vpop.f32.mrf.mxu0
    %v130 = vadd.f32 0.0, %v129
    %131 = vdwg.mxu0
    %v133 = vsel %vm104, %v98, 0
    %v136 = vsel %vm108, %v100, 0
    %138 = vmatpush.msra.mxu0 0.0
    %139 = vmatpush.msra.mxu0 0.0
    %140 = vmatpush.msra.mxu0 0.0
    %141 = vmatpush.msra.mxu0 0.0
    %142 = vmatpush.msra.mxu0 0.0
    %143 = vmatpush.msra.mxu0 0.0
    %144 = vmatpush.msra.mxu0 0.0
    %145 = vmatpush.msra.mxu0 0.0
    %146 = vmatpush.msra.mxu0 0.0
    %147 = vmatpush.msra.mxu0 0.0
    %148 = vmatpush.msra.mxu0 0.0
    %149 = vmatpush.msra.mxu0 0.0
    %150 = vmatpush.msra.mxu0 0.0
    %151 = vmatpush.msra.mxu0 0.0
    %152 = vmatpush.msra.mxu0 %v136
    %153 = vmatpush.msra.mxu0 %v99
    %154 = vmatmul.f32.gmra.mxu0 %v133
    %v155 = vpop.f32.mrf.mxu0
    %v156 = vadd.f32 %v130, %v155
    %157 = vdwg.mxu0
    %v158 = vld [vmem:[%s4] sm:$0x1]
    %v159 = vperm.slane %v158, 0
    %v160 = vadd.f32 %v156, %v159
    %vm161 = vcmp.ge.f32.partialorder %v160, 0.0
    %v162 = vmul.f32 %v160, 0.1
    %v163 = vsel %vm161, %v160, %v162
    %v164 = vld [vmem:[#allocation10] sm:$0xff]
    %v165 = vld [vmem:[#allocation10 + $0x8] sm:$0xff]
    %v166 = vld [vmem:[#allocation10 + $0x10] sm:$0xff]
    %v167 = vld [vmem:[#allocation10 + $0x18] sm:$0xff]
    %v168 = vld [vmem:[#allocation10 + $0x20] sm:$0xff]
    %v169 = vld [vmem:[#allocation10 + $0x28] sm:$0xff]
    %v170 = vld [vmem:[#allocation10 + $0x30] sm:$0xff]
    %v171 = vld [vmem:[#allocation10 + $0x38] sm:$0xff]
    %v172 = vld [vmem:[#allocation10 + $0x40] sm:$0xff]
    %v173 = vld [vmem:[#allocation10 + $0x48] sm:$0xff]
    %v174 = vld [vmem:[#allocation10 + $0x50] sm:$0xff]
    %v175 = vld [vmem:[#allocation10 + $0x58] sm:$0xff]
    %v176 = vld [vmem:[#allocation10 + $0x60] sm:$0xff]
    %v177 = vld [vmem:[#allocation10 + $0x68] sm:$0xff]
    %v178 = vld [vmem:[#allocation10 + $0x70] sm:$0xff]
    %v179 = vld [vmem:[#allocation10 + $0x78] sm:$0xff]
    %v180 = vld [vmem:[%s4 + $0x1] sm:$0x1]
    %v181 = vperm.slane %v180, 0
    %182 = vmatpush.msra.mxu0 %v179
    %183 = vmatpush.msra.mxu0 %v178
    %184 = vmatpush.msra.mxu0 %v177
    %185 = vmatpush.msra.mxu0 %v176
    %186 = vmatpush.msra.mxu0 %v175
    %187 = vmatpush.msra.mxu0 %v174
    %188 = vmatpush.msra.mxu0 %v173
    %189 = vmatpush.msra.mxu0 %v172
    %190 = vmatpush.msra.mxu0 %v171
    %191 = vmatpush.msra.mxu0 %v170
    %192 = vmatpush.msra.mxu0 %v169
    %193 = vmatpush.msra.mxu0 %v168
    %194 = vmatpush.msra.mxu0 %v167
    %195 = vmatpush.msra.mxu0 %v166
    %196 = vmatpush.msra.mxu0 %v165
    %197 = vmatpush.msra.mxu0 %v164
    %198 = vmatmul.f32.gmra.mxu0 %v163
    %v199 = vpop.f32.mrf.mxu0
    %v200 = vadd.f32 %v181, %v199
    %201 = vdwg.mxu0
    %202 = vst [vmem:[#allocation11] sm:$0x3] %v200
    // Predicated region
    $region46: #{tpu_custom_call.1} parent=1 // pred_check
      _
    $region47: #{tpu_custom_call.1} parent=1 // pred_check_branch
      %204 = sbr.rel (0) target = $region49
    $region48: #{tpu_custom_call.1} parent=1 // pred_region
      %206 = vsyncadd [#allocation4], 0
      %s208 = sshll.u32 [#allocation11], 4
      %s209 = int_to_ptr.vmem [resolvable:$true] %s208
      %s210 = sshll.u32 %s6, 4
      %s211 = int_to_ptr.hbm [resolvable:$true] %s210
      %213 = dma.vmem_to_hbm [thread:$0]  %s209, 32, %s211, [#allocation4]
    $region49: #{tpu_custom_call.1} parent=1 // pred_fallthru
      _
    // Predicated region
    $region50: #{tpu_custom_call.1} parent=1 // pred_check
      _
    $region51: #{tpu_custom_call.1} parent=1 // pred_check_branch
      %215 = sbr.rel (0) target = $region53
    $region52: #{tpu_custom_call.1} parent=1 // pred_region
      %217 = dma.done [#allocation4], 32
    $region53: #{tpu_custom_call.1} parent=1 // pred_fallthru
      _
    %218 = vsyncpa [#allocation3], 1
    %219 = vsyncpa [#allocation6], 1
    %220 = vsyncpa [#allocation9], 1
    %221 = vsyncpa [#allocation4], 1

</llo_original>
